<compile_context>
chip_gen: v6e
topology: v6e:2x2x1
jax: 0.10.0
libtpu: 0.0.40
codegen_flags: <defaults>
</compile_context>

<pallas_src>
import functools

import jax
import jax.numpy as jnp
from jax.experimental import pallas as pl
from jax.experimental.pallas import tpu as pltpu


def _ce_partial_kernel(x_ref, t_ref, psum_ref, pcnt_ref, ce_acc, cnt_acc, *,
                       ignore_index):
    """Per-image cross-entropy partial sums.

    x_ref:    (1, C, TP)  logits tile (classes on sublanes, pixels on lanes)
    t_ref:    (1, 1, TP)  int32 class ids tile
    psum_ref: (1, 8, 128) per-image CE sum (written on last pixel step)
    pcnt_ref: (1, 8, 128) per-image valid-pixel count (written on last pixel step)
    ce_acc:   (1, TP)     f32 per-lane running CE sums      (VMEM scratch)
    cnt_acc:  (1, TP)     f32 per-lane running valid counts (VMEM scratch)
    """
    p = pl.program_id(1)

    @pl.when(p == 0)
    def _():
        ce_acc[...] = jnp.zeros_like(ce_acc)
        cnt_acc[...] = jnp.zeros_like(cnt_acc)

    x = x_ref[0].astype(jnp.float32)          # (C, TP)
    t = t_ref[0]                              # (1, TP) int32

    # Numerically stable log-sum-exp over classes (sublane axis).
    m = jnp.max(x, axis=0, keepdims=True)                              # (1, TP)
    lse = m + jnp.log(jnp.sum(jnp.exp(x - m), axis=0, keepdims=True))  # (1, TP)

    # Gather x[target, pixel] via one-hot select (no dynamic gather on TPU).
    cls = jax.lax.broadcasted_iota(jnp.int32, x.shape, 0)              # (C, TP)
    x_t = jnp.sum(jnp.where(cls == t, x, 0.0), axis=0, keepdims=True)  # (1, TP)

    valid = t != ignore_index                                          # (1, TP)
    ce = jnp.where(valid, lse - x_t, 0.0)                              # (1, TP)

    ce_acc[...] += ce
    cnt_acc[...] += valid.astype(jnp.float32)

    @pl.when(p == pl.num_programs(1) - 1)
    def _():
        psum_ref[...] = jnp.full(psum_ref.shape, jnp.sum(ce_acc[...]),
                                 dtype=jnp.float32)
        pcnt_ref[...] = jnp.full(pcnt_ref.shape, jnp.sum(cnt_acc[...]),
                                 dtype=jnp.float32)


def _vmem_budget_bytes():
    """Per-generation VMEM budget for the kernel's working set."""
    try:
        cap = int(pltpu.get_tpu_info().vmem_capacity_bytes)
    except Exception:
        cap = 64 << 20  # conservative default (v7x per-core VMEM)
    return min(cap // 3, 24 << 20)


def _pick_pixel_tile(n_classes, n_pixels, x_itemsize, vmem_budget):
    """Largest lane tile TP that divides n_pixels, is a multiple of 128, and keeps
    the double-buffered VMEM working set under vmem_budget."""
    if n_pixels % 128 != 0:
        return n_pixels  # full-row block is always legal
    c_pad = -(-n_classes // 8) * 8  # class axis is sublane-padded to 8 in VMEM
    # Per-pixel VMEM bytes: 2x logits buffers + 2x i32 target buffers (padded to
    # 8 sublanes) + 2x f32 per-lane accumulators (padded to 8 sublanes).
    per_pixel = 2 * c_pad * x_itemsize + 2 * 8 * 4 + 2 * 8 * 4
    cap = max(128, vmem_budget // per_pixel)
    best, tp = 128, 128
    limit = min(n_pixels, cap)
    while tp <= limit:
        if n_pixels % tp == 0:
            best = tp
        tp += 128
    return best


def focal_loss_2d(logits_nchw, target_nhw, gamma=0.0, weight=None,
                  size_average=True, ignore_index=-100, pixel_tile=None):
    """JAX/Pallas equivalent of FocalLoss2d.forward for 4-D input / 3-D target."""
    del weight  # Unused in the reference loss math (never passed to cross_entropy).
    N, C, H, W = logits_nchw.shape
    HW = H * W

    # Contiguous views only — no host-side transpose / extra HBM pass.
    x = logits_nchw.reshape(N, C, HW)
    t = target_nhw.reshape(N, 1, HW).astype(jnp.int32)

    itemsize = jnp.dtype(logits_nchw.dtype).itemsize
    tp = pixel_tile or _pick_pixel_tile(C, HW, itemsize, _vmem_budget_bytes())
    steps = HW // tp

    kernel = functools.partial(_ce_partial_kernel, ignore_index=int(ignore_index))

    psum, pcnt = pl.pallas_call(
        kernel,
        out_shape=(jax.ShapeDtypeStruct((N, 8, 128), jnp.float32),
                   jax.ShapeDtypeStruct((N, 8, 128), jnp.float32)),
        grid_spec=pltpu.PrefetchScalarGridSpec(
            num_scalar_prefetch=0,
            grid=(N, steps),
            in_specs=[
                pl.BlockSpec((1, C, tp), lambda n, p: (n, 0, p)),
                pl.BlockSpec((1, 1, tp), lambda n, p: (n, 0, p)),
            ],
            out_specs=[
                pl.BlockSpec((1, 8, 128), lambda n, p: (n, 0, 0)),
                pl.BlockSpec((1, 8, 128), lambda n, p: (n, 0, 0)),
            ],
            scratch_shapes=[
                pltpu.VMEM((1, tp), jnp.float32),   # per-lane CE accumulator
                pltpu.VMEM((1, tp), jnp.float32),   # per-lane valid-count accumulator
            ],
        ),
        compiler_params=pltpu.CompilerParams(
            dimension_semantics=("parallel", "arbitrary"),
            vmem_limit_bytes=32 * 1024 * 1024,
        ),
    )(x, t)

    # O(1) epilogue in the wrapper (lets the batch axis stay 'parallel').
    ce_sum = jnp.sum(psum[:, 0, 0])
    cnt = jnp.sum(pcnt[:, 0, 0])          # non-ignored pixels (F.cross_entropy mean)
    mean_ce = ce_sum / cnt
    logpt = -mean_ce
    pt = jnp.exp(logpt)
    one_minus_pt = jnp.maximum(1.0 - pt, 0.0)   # fp guard: pt can round above 1
    loss = -(one_minus_pt ** gamma) * logpt
    # size_average=True -> .mean() of a scalar, False -> .sum(): both identity.
    return loss


if __name__ == "__main__":
    key = jax.random.PRNGKey(0)
    k1, k2 = jax.random.split(key, 2)

    N, C, H, W = 2, 4, 16, 16
    logits = jax.random.normal(k1, (N, C, H, W), dtype=jnp.float32)
    target = jax.random.randint(k2, (N, H, W), 0, C, dtype=jnp.int32)
    # Deterministic per-class weight (shape (C,)); unused by the reference forward.
    weight = jnp.linspace(0.5, 1.5, C, dtype=jnp.float32)

    gamma = 2.0
    loss = focal_loss_2d(logits, target, gamma=gamma, weight=weight,
                         size_average=True)
    loss = jax.block_until_ready(loss)

    # Pure-JAX reference of the PyTorch forward.
    x_ref = logits.reshape(N, C, H * W).transpose(0, 2, 1).reshape(-1, C)
    t_ref = target.reshape(-1)
    logp = jax.nn.log_softmax(x_ref, axis=-1)
    ce = -jnp.take_along_axis(logp, t_ref[:, None], axis=-1)[:, 0]
    logpt = -jnp.mean(ce)
    pt = jnp.exp(logpt)
    ref = -((1.0 - pt) ** gamma) * logpt

    assert jnp.allclose(loss, ref, rtol=1e-4, atol=1e-5), (float(loss), float(ref))
    print("KERNEL_OK")
</pallas_src>

<mosaic_0001>
module attributes {stable_mosaic.version = 11 : i64} {
  func.func @_ce_partial_kernel(%arg0: i32, %arg1: i32, %arg2: memref<1x4x256xf32, #tpu.memory_space<vmem>>, %arg3: memref<1x1x256xi32, #tpu.memory_space<vmem>>, %arg4: memref<1x8x128xf32, #tpu.memory_space<vmem>>, %arg5: memref<1x8x128xf32, #tpu.memory_space<vmem>>, %arg6: memref<1x256xf32, #tpu.memory_space<vmem>>, %arg7: memref<1x256xf32, #tpu.memory_space<vmem>>) attributes {dimension_semantics = [#tpu.dimension_semantics<parallel>, #tpu.dimension_semantics<arbitrary>], iteration_bounds = array<i64: 2, 1>, scalar_prefetch = 0 : i64, scratch_operands = 2 : i64, tpu.core_type = #tpu.core_type<tc>, window_params = [{transform_indices = @transform_0, window_bounds = array<i64: 1, 4, 256>}, {transform_indices = @transform_1, window_bounds = array<i64: 1, 1, 256>}, {transform_indices = @transform_2, window_bounds = array<i64: 1, 8, 128>}, {transform_indices = @transform_3, window_bounds = array<i64: 1, 8, 128>}]} {
    %c0_i32 = arith.constant 0 : i32
    %0 = arith.cmpi eq, %arg1, %c0_i32 : i32
    %1 = arith.extui %0 : i1 to i32
    %c0_i32_0 = arith.constant 0 : i32
    %2 = arith.cmpi ne, %1, %c0_i32_0 : i32
    scf.if %2 {
      %cst_20 = arith.constant 0.000000e+00 : f32
      %39 = vector.broadcast %cst_20 : f32 to vector<1x256xf32>
      %c0_21 = arith.constant 0 : index
      %c0_22 = arith.constant 0 : index
      %40 = vector.load %arg6[%c0_21, %c0_22] : memref<1x256xf32, #tpu.memory_space<vmem>>, vector<1x256xf32>
      tpu.vector_store %arg6[%c0_21, %c0_22], %39 {strides = array<i32>} : memref<1x256xf32, #tpu.memory_space<vmem>>, vector<1x256xf32>,
      %cst_23 = arith.constant 0.000000e+00 : f32
      %41 = vector.broadcast %cst_23 : f32 to vector<1x256xf32>
      %c0_24 = arith.constant 0 : index
      %c0_25 = arith.constant 0 : index
      %42 = vector.load %arg7[%c0_24, %c0_25] : memref<1x256xf32, #tpu.memory_space<vmem>>, vector<1x256xf32>
      tpu.vector_store %arg7[%c0_24, %c0_25], %41 {strides = array<i32>} : memref<1x256xf32, #tpu.memory_space<vmem>>, vector<1x256xf32>,
    } else {
    }
    %c0 = arith.constant 0 : index
    %c0_1 = arith.constant 0 : index
    %c0_2 = arith.constant 0 : index
    %3 = vector.load %arg2[%c0, %c0_1, %c0_2] : memref<1x4x256xf32, #tpu.memory_space<vmem>>, vector<1x4x256xf32>
    %4 = vector.shape_cast %3 : vector<1x4x256xf32> to vector<4x256xf32>
    %c0_3 = arith.constant 0 : index
    %c0_4 = arith.constant 0 : index
    %c0_5 = arith.constant 0 : index
    %5 = vector.load %arg3[%c0_3, %c0_4, %c0_5] : memref<1x1x256xi32, #tpu.memory_space<vmem>>, vector<1x1x256xi32>
    %6 = vector.shape_cast %5 : vector<1x1x256xi32> to vector<1x256xi32>
    %cst = arith.constant dense<0xFF800000> : vector<256xf32>
    %7 = vector.multi_reduction <maximumf>, %4, %cst [0] : vector<4x256xf32> to vector<256xf32>
    %8 = vector.shape_cast %7 : vector<256xf32> to vector<1x256xf32>
    %9 = vector.broadcast %8 : vector<1x256xf32> to vector<4x256xf32>
    %10 = arith.subf %4, %9 : vector<4x256xf32>
    %11 = math.exp %10 : vector<4x256xf32>
    %cst_6 = arith.constant dense<0.000000e+00> : vector<256xf32>
    %12 = vector.multi_reduction <add>, %11, %cst_6 [0] : vector<4x256xf32> to vector<256xf32>
    %13 = vector.shape_cast %12 : vector<256xf32> to vector<1x256xf32>
    %14 = math.log %13 : vector<1x256xf32>
    %15 = arith.addf %8, %14 : vector<1x256xf32>
    %16 = tpu.iota {dimensions = array<i32: 0>} : vector<4x256xi32>
    %17 = vector.broadcast %6 : vector<1x256xi32> to vector<4x256xi32>
    %18 = arith.cmpi eq, %16, %17 : vector<4x256xi32>
    %cst_7 = arith.constant 0.000000e+00 : f32
    %19 = vector.broadcast %cst_7 : f32 to vector<4x256xf32>
    %20 = arith.select %18, %4, %19 : vector<4x256xi1>, vector<4x256xf32>
    %cst_8 = arith.constant dense<0.000000e+00> : vector<256xf32>
    %21 = vector.multi_reduction <add>, %20, %cst_8 [0] : vector<4x256xf32> to vector<256xf32>
    %22 = vector.shape_cast %21 : vector<256xf32> to vector<1x256xf32>
    %c-100_i32 = arith.constant -100 : i32
    %23 = vector.broadcast %c-100_i32 : i32 to vector<1x256xi32>
    %24 = arith.cmpi ne, %6, %23 : vector<1x256xi32>
    %25 = arith.subf %15, %22 : vector<1x256xf32>
    %cst_9 = arith.constant 0.000000e+00 : f32
    %26 = vector.broadcast %cst_9 : f32 to vector<1x256xf32>
    %27 = arith.select %24, %25, %26 : vector<1x256xi1>, vector<1x256xf32>
    %c0_10 = arith.constant 0 : index
    %c0_11 = arith.constant 0 : index
    %28 = vector.load %arg6[%c0_10, %c0_11] : memref<1x256xf32, #tpu.memory_space<vmem>>, vector<1x256xf32>
    %29 = arith.addf %28, %27 : vector<1x256xf32>
    %c0_12 = arith.constant 0 : index
    %c0_13 = arith.constant 0 : index
    %30 = vector.load %arg6[%c0_12, %c0_13] : memref<1x256xf32, #tpu.memory_space<vmem>>, vector<1x256xf32>
    tpu.vector_store %arg6[%c0_12, %c0_13], %29 {strides = array<i32>} : memref<1x256xf32, #tpu.memory_space<vmem>>, vector<1x256xf32>,
    %c0_14 = arith.constant 0 : index
    %c0_15 = arith.constant 0 : index
    %31 = vector.load %arg7[%c0_14, %c0_15] : memref<1x256xf32, #tpu.memory_space<vmem>>, vector<1x256xf32>
    %32 = arith.extui %24 : vector<1x256xi1> to vector<1x256xi32>
    %33 = arith.sitofp %32 : vector<1x256xi32> to vector<1x256xf32>
    %34 = arith.addf %31, %33 : vector<1x256xf32>
    %c0_16 = arith.constant 0 : index
    %c0_17 = arith.constant 0 : index
    %35 = vector.load %arg7[%c0_16, %c0_17] : memref<1x256xf32, #tpu.memory_space<vmem>>, vector<1x256xf32>
    tpu.vector_store %arg7[%c0_16, %c0_17], %34 {strides = array<i32>} : memref<1x256xf32, #tpu.memory_space<vmem>>, vector<1x256xf32>,
    %c0_i32_18 = arith.constant 0 : i32
    %36 = arith.cmpi eq, %arg1, %c0_i32_18 : i32
    %37 = arith.extui %36 : i1 to i32
    %c0_i32_19 = arith.constant 0 : i32
    %38 = arith.cmpi ne, %37, %c0_i32_19 : i32
    scf.if %38 {
      %c0_20 = arith.constant 0 : index
      %c0_21 = arith.constant 0 : index
      %39 = vector.load %arg6[%c0_20, %c0_21] : memref<1x256xf32, #tpu.memory_space<vmem>>, vector<1x256xf32>
      %40 = vector.shape_cast %39 : vector<1x256xf32> to vector<1x1x256xf32>
      %cst_22 = arith.constant dense<0.000000e+00> : vector<1xf32>
      %41 = vector.multi_reduction <add>, %40, %cst_22 [1, 2] : vector<1x1x256xf32> to vector<1xf32>
      %42 = vector.shape_cast %41 : vector<1xf32> to vector<1x1x1xf32>
      %43 = vector.extract %42[0, 0, 0] : f32 from vector<1x1x1xf32>
      %44 = vector.broadcast %43 : f32 to vector<1x8x128xf32>
      %c0_23 = arith.constant 0 : index
      %c0_24 = arith.constant 0 : index
      %c0_25 = arith.constant 0 : index
      %45 = vector.load %arg4[%c0_23, %c0_24, %c0_25] : memref<1x8x128xf32, #tpu.memory_space<vmem>>, vector<1x8x128xf32>
      tpu.vector_store %arg4[%c0_23, %c0_24, %c0_25], %44 {strides = array<i32>} : memref<1x8x128xf32, #tpu.memory_space<vmem>>, vector<1x8x128xf32>,
      %c0_26 = arith.constant 0 : index
      %c0_27 = arith.constant 0 : index
      %46 = vector.load %arg7[%c0_26, %c0_27] : memref<1x256xf32, #tpu.memory_space<vmem>>, vector<1x256xf32>
      %47 = vector.shape_cast %46 : vector<1x256xf32> to vector<1x1x256xf32>
      %cst_28 = arith.constant dense<0.000000e+00> : vector<1xf32>
      %48 = vector.multi_reduction <add>, %47, %cst_28 [1, 2] : vector<1x1x256xf32> to vector<1xf32>
      %49 = vector.shape_cast %48 : vector<1xf32> to vector<1x1x1xf32>
      %50 = vector.extract %49[0, 0, 0] : f32 from vector<1x1x1xf32>
      %51 = vector.broadcast %50 : f32 to vector<1x8x128xf32>
      %c0_29 = arith.constant 0 : index
      %c0_30 = arith.constant 0 : index
      %c0_31 = arith.constant 0 : index
      %52 = vector.load %arg5[%c0_29, %c0_30, %c0_31] : memref<1x8x128xf32, #tpu.memory_space<vmem>>, vector<1x8x128xf32>
      tpu.vector_store %arg5[%c0_29, %c0_30, %c0_31], %51 {strides = array<i32>} : memref<1x8x128xf32, #tpu.memory_space<vmem>>, vector<1x8x128xf32>,
    } else {
    }
    return
  }
  func.func @transform_0(%arg0: i32, %arg1: i32) -> (i32, i32, i32) {
    %c0_i32 = arith.constant 0 : i32
    %c0_i32_0 = arith.constant 0 : i32
    return %arg0, %c0_i32, %arg1 : i32, i32, i32
  }
  func.func @transform_1(%arg0: i32, %arg1: i32) -> (i32, i32, i32) {
    %c0_i32 = arith.constant 0 : i32
    %c0_i32_0 = arith.constant 0 : i32
    return %arg0, %c0_i32, %arg1 : i32, i32, i32
  }
  func.func @transform_2(%arg0: i32, %arg1: i32) -> (i32, i32, i32) {
    %c0_i32 = arith.constant 0 : i32
    %c0_i32_0 = arith.constant 0 : i32
    %c0_i32_1 = arith.constant 0 : i32
    return %arg0, %c0_i32, %c0_i32_0 : i32, i32, i32
  }
  func.func @transform_3(%arg0: i32, %arg1: i32) -> (i32, i32, i32) {
    %c0_i32 = arith.constant 0 : i32
    %c0_i32_0 = arith.constant 0 : i32
    %c0_i32_1 = arith.constant 0 : i32
    return %arg0, %c0_i32, %c0_i32_0 : i32, i32, i32
  }
}

</mosaic_0001>

<llo_original>
// kernel: tpu_custom_call.1
$region0: #{tpu_custom_call.1}
  #allocation0 [shape = 'u32[]', space=smem, size = 0x4, offset = 0x4, fixed_abs, tag = 'smem constant byte address 0x4 - core index']
  #allocation1 [shape = 'u32[144,128]{1,0:T(1,128)}', space=vmem, size = 0x12000, scoped, tag = 'internal scratch']
  #allocation2 [shape = 'f32[1,256]{1,0:T(1,128)}', space=vmem, size = 0x400, scoped, tag = 'scratch operand']
  #allocation3 [shape = 'f32[1,256]{1,0:T(1,128)}', space=vmem, size = 0x400, scoped, tag = 'scratch operand']
  %s0 = inlined_call_operand.hbm [shape: f32[2,4,256], index: 0, kind: input, shape index: {}]
  %s1 = inlined_call_operand.hbm [shape: s32[2,1,256], index: 1, kind: input, shape index: {}]
  %s2 = inlined_call_operand.hbm [shape: f32[2,8,128], index: 2, kind: output, shape index: {0}]
  %s3 = inlined_call_operand.hbm [shape: f32[2,8,128], index: 3, kind: output, shape index: {1}]
  %4 = xla_tuple %s2, %s3
  %s5 = sld [smem:[#allocation0]]
  $region65: #{tpu_custom_call.1} parent=0
    _
  %s7 = ssub.s32 1, %s5
  %s8 = scalar_select 0, %s7, %s5
  $region1: #{tpu_custom_call.1} parent=0
    #allocation4 [shape = 'u8[8192]{0}', space=vmem, size = 0x2000, scoped, tag = 'input window, operand 0']
    #allocation5 [shape = 's32[2]{0}', space=sflag, size = 0x8, scoped, tag = 'scoped memory for tpu_custom_call.1']
    #allocation6 [shape = 's32[2]{0}', space=sflag, size = 0x8, scoped, tag = 'scoped memory for tpu_custom_call.1']
    #allocation7 [shape = 'u8[2048]{0}', space=vmem, size = 0x800, scoped, tag = 'input window, operand 1']
    #allocation8 [shape = 's32[2]{0}', space=sflag, size = 0x8, scoped, tag = 'scoped memory for tpu_custom_call.1']
    #allocation9 [shape = 'u8[8192]{0}', space=vmem, size = 0x2000, scoped, tag = 'output window, operand 0']
    #allocation10 [shape = 'u8[8192]{0}', space=vmem, size = 0x2000, scoped, tag = 'output window, operand 1']
    #allocation11 [shape = 's32[2]{0}', space=sflag, size = 0x8, scoped, tag = 'scoped memory for tpu_custom_call.1']
    %9 = vsyncpa [#allocation5], 0
    %s10 = scalar_lea.sflag [#allocation5], 1
    %11 = vsyncpa %s10, 0
    %12 = vsyncpa [#allocation8], 0
    %s13 = scalar_lea.sflag [#allocation8], 1
    %14 = vsyncpa %s13, 0
    %15 = vsyncpa [#allocation6], 0
    %s16 = scalar_lea.sflag [#allocation6], 1
    %17 = vsyncpa %s16, 0
    %18 = vsyncpa [#allocation11], 0
    %s19 = scalar_lea.sflag [#allocation11], 1
    %20 = vsyncpa %s19, 0
    loop: start=0, step=1, limit=4
    $region2: #{tpu_custom_call.1} parent=1 // loop_pre_header
      _
    $region3: #{tpu_custom_call.1} parent=1 // loop_header
      %s22 = sphi 0, %s26
      %p23 = scmp.ge.s32.totalorder %s22, 4
      %s29 = sphi 0, %s41
      %s30 = sphi 0, %s37
      %s31 = sphi 0, %s29
      %s32 = sphi 0, %s30
      %s33 = sphi 0, %s31
      %s34 = sphi 0, %s32
      %s46 = sphi 0, %s48
      %s49 = sphi 0, %s46
      %s50 = sphi 0, %s49
      %s66 = sphi 0, %s50
      %s74 = sphi 0, %s76
      %s77 = sphi 0, %s74
      %s78 = sphi 0, %s77
      %s94 = sphi 0, %s78
      %s100 = sphi 0, %s102
      %s103 = sphi 0, %s100
      %s104 = sphi 0, %s103
      %s120 = sphi 0, %s104
      %s126 = sphi 0, %s128
      %s129 = sphi 0, %s126
      %s130 = sphi 0, %s129
      %s146 = sphi 0, %s130
    $region4: #{tpu_custom_call.1} parent=1 // loop_header_branch
      %25 = sbr.rel (%p23) target = $region8
    $region5: #{tpu_custom_call.1} parent=1 // loop_body
      %s27 = ssub.s32 %s22, 1
      %s28 = ssub.s32 %s22, 2
      %s35 = sadd.s32 1, %s30
      %p36 = scmp.ge.s32.totalorder %s35, 1
      %s37 = scalar_select %p36, 0, %s35
      %s38 = sadd.s32 1, %s29
      %s39 = scalar_select %p36, %s38, %s29
      %p40 = scmp.ge.s32.totalorder %s39, 2
      %s41 = scalar_select %p40, 0, %s39
      %s42 = ssub.s32 %s29, %s41
      %s43 = ssub.s32 %s30, %s37
      %s44 = sor.u32 %s42, %s43
      %p45 = scmp.eq.s32.totalorder %s44, 0
      %s47 = sadd.s32 %s46, 1
      %s48 = scalar_select %p45, %s46, %s47
      %p51 = pneg %p45
      %p52 = scmp.eq.s32.totalorder %s22, 1
      %p53 = por %p51, %p52
      %p54 = scmp.ne.s32.totalorder %s46, %s49
      %p55 = scmp.eq.s32.totalorder %s22, 0
      %p56 = por %p54, %p55
      %p57 = scmp.ne.s32.totalorder %s46, %s49
      %p58 = scmp.eq.s32.totalorder %s27, 1
      %p59 = por %p57, %p58
      %p60 = scmp.ne.s32.totalorder %s49, %s50
      %p61 = scmp.eq.s32.totalorder %s27, 0
      %p62 = por %p60, %p61
      %p63 = scmp.ne.s32.totalorder %s49, %s50
      %p64 = scmp.eq.s32.totalorder %s28, 1
      %p65 = por %p63, %p64
      %p67 = scmp.ne.s32.totalorder %s50, %s66
      %p68 = scmp.eq.s32.totalorder %s28, 0
      %p69 = por %p67, %p68
      %s70 = ssub.s32 %s29, %s41
      %s71 = ssub.s32 %s30, %s37
      %s72 = sor.u32 %s70, %s71
      %p73 = scmp.eq.s32.totalorder %s72, 0
      %s75 = sadd.s32 %s74, 1
      %s76 = scalar_select %p73, %s74, %s75
      %p79 = pneg %p73
      %p80 = scmp.eq.s32.totalorder %s22, 1
      %p81 = por %p79, %p80
      %p82 = scmp.ne.s32.totalorder %s74, %s77
      %p83 = scmp.eq.s32.totalorder %s22, 0
      %p84 = por %p82, %p83
      %p85 = scmp.ne.s32.totalorder %s74, %s77
      %p86 = scmp.eq.s32.totalorder %s27, 1
      %p87 = por %p85, %p86
      %p88 = scmp.ne.s32.totalorder %s77, %s78
      %p89 = scmp.eq.s32.totalorder %s27, 0
      %p90 = por %p88, %p89
      %p91 = scmp.ne.s32.totalorder %s77, %s78
      %p92 = scmp.eq.s32.totalorder %s28, 1
      %p93 = por %p91, %p92
      %p95 = scmp.ne.s32.totalorder %s78, %s94
      %p96 = scmp.eq.s32.totalorder %s28, 0
      %p97 = por %p95, %p96
      %s98 = ssub.s32 %s29, %s41
      %p99 = scmp.eq.s32.totalorder %s98, 0
      %s101 = sadd.s32 %s100, 1
      %s102 = scalar_select %p99, %s100, %s101
      %p105 = pneg %p99
      %p106 = scmp.eq.s32.totalorder %s22, 1
      %p107 = por %p105, %p106
      %p108 = scmp.ne.s32.totalorder %s100, %s103
      %p109 = scmp.eq.s32.totalorder %s22, 0
      %p110 = por %p108, %p109
      %p111 = scmp.ne.s32.totalorder %s100, %s103
      %p112 = scmp.eq.s32.totalorder %s27, 1
      %p113 = por %p111, %p112
      %p114 = scmp.ne.s32.totalorder %s103, %s104
      %p115 = scmp.eq.s32.totalorder %s27, 0
      %p116 = por %p114, %p115
      %p117 = scmp.ne.s32.totalorder %s103, %s104
      %p118 = scmp.eq.s32.totalorder %s28, 1
      %p119 = por %p117, %p118
      %p121 = scmp.ne.s32.totalorder %s104, %s120
      %p122 = scmp.eq.s32.totalorder %s28, 0
      %p123 = por %p121, %p122
      %s124 = ssub.s32 %s29, %s41
      %p125 = scmp.eq.s32.totalorder %s124, 0
      %s127 = sadd.s32 %s126, 1
      %s128 = scalar_select %p125, %s126, %s127
      %p131 = pneg %p125
      %p132 = scmp.eq.s32.totalorder %s22, 1
      %p133 = por %p131, %p132
      %p134 = scmp.ne.s32.totalorder %s126, %s129
      %p135 = scmp.eq.s32.totalorder %s22, 0
      %p136 = por %p134, %p135
      %p137 = scmp.ne.s32.totalorder %s126, %s129
      %p138 = scmp.eq.s32.totalorder %s27, 1
      %p139 = por %p137, %p138
      %p140 = scmp.ne.s32.totalorder %s129, %s130
      %p141 = scmp.eq.s32.totalorder %s27, 0
      %p142 = por %p140, %p141
      %p143 = scmp.ne.s32.totalorder %s129, %s130
      %p144 = scmp.eq.s32.totalorder %s28, 1
      %p145 = por %p143, %p144
      %p147 = scmp.ne.s32.totalorder %s130, %s146
      %p148 = scmp.eq.s32.totalorder %s28, 0
      %p149 = por %p147, %p148
      %p150 = scmp.le.s32.totalorder 1, %s22
      %p151 = scmp.lt.s32.totalorder %s22, 3
      %p152 = pnand %p150, %p151
      %p153 = pneg %p152
      // Predicated region
      $region9: #{tpu_custom_call.1} parent=5 // pred_check
        _
      $region10: #{tpu_custom_call.1} parent=5 // pred_check_branch
        %155 = sbr.rel (%p152) target = $region12
      $region11: #{tpu_custom_call.1} parent=5 // pred_region
        %s156 = ssub.s32 %s22, 1
      $region12: #{tpu_custom_call.1} parent=5 // pred_fallthru
        _
      %p157 = scmp.lt.s32.totalorder %s22, 2
      // Predicated region
      $region13: #{tpu_custom_call.1} parent=5 // pred_check
        %p158 = pneg %p157
      $region14: #{tpu_custom_call.1} parent=5 // pred_check_branch
        %160 = sbr.rel (%p158) target = $region16
      $region15: #{tpu_custom_call.1} parent=5 // pred_region
        // Predicated region
        $region17: #{tpu_custom_call.1} parent=15 // pred_check
          %p161 = pneg %p56
        $region18: #{tpu_custom_call.1} parent=15 // pred_check_branch
          %163 = sbr.rel (%p161) target = $region20
        $region19: #{tpu_custom_call.1} parent=15 // pred_region
          %s164 = sand.u32 %s46, 1
          %s165 = scalar_lea.sflag [#allocation5], %s164
          %s166 = sand.u32 %s46, 1
          %s167 = smul.addr %s166, 8
          %s168 = scalar_lea.vmem [#allocation4], %s167
          %s169 = smul.u32 2, %s30
          %s171 = ssub.s32 128, 128
          %172 = vsyncadd %s165, %s171
          %s173 = smul.addr %s29, 2
          %s174 = sadd.s32 %s169, %s173
          %s175 = smul.addr %s174, 64
          %s176 = scalar_lea.hbm %s0, %s175
          %s178 = sshll.u32 %s168, 4
          %s179 = int_to_ptr.vmem [resolvable:$true] %s178
          %181 = dma.hbm_to_vmem [thread:$0]  %s176, 128, %s179, %s165
        $region20: #{tpu_custom_call.1} parent=15 // pred_fallthru
          _
        // Predicated region
        $region21: #{tpu_custom_call.1} parent=15 // pred_check
          %p182 = pneg %p84
        $region22: #{tpu_custom_call.1} parent=15 // pred_check_branch
          %184 = sbr.rel (%p182) target = $region24
        $region23: #{tpu_custom_call.1} parent=15 // pred_region
          %s185 = sand.u32 %s74, 1
          %s186 = scalar_lea.sflag [#allocation8], %s185
          %s187 = sand.u32 %s74, 1
          %s188 = smul.addr %s187, 2
          %s189 = scalar_lea.vmem [#allocation7], %s188
          %s190 = smul.u32 2, %s30
          %s192 = ssub.s32 32, 32
          %193 = vsyncadd %s186, %s192
          %s194 = smul.addr %s29, 2
          %s195 = sadd.s32 %s190, %s194
          %s196 = smul.addr %s195, 16
          %s197 = scalar_lea.hbm %s1, %s196
          %s199 = sshll.u32 %s189, 4
          %s200 = int_to_ptr.vmem [resolvable:$true] %s199
          %202 = dma.hbm_to_vmem [thread:$0]  %s197, 32, %s200, %s186
        $region24: #{tpu_custom_call.1} parent=15 // pred_fallthru
          _
      $region16: #{tpu_custom_call.1} parent=5 // pred_fallthru
        _
      %p203 = scmp.le.s32.totalorder 1, %s22
      %p204 = scmp.lt.s32.totalorder %s22, 3
      %p205 = pnand %p203, %p204
      %p206 = pneg %p205
      // Predicated region
      $region25: #{tpu_custom_call.1} parent=5 // pred_check
        _
      $region26: #{tpu_custom_call.1} parent=5 // pred_check_branch
        %208 = sbr.rel (%p205) target = $region28
      $region27: #{tpu_custom_call.1} parent=5 // pred_region
        %s209 = ssub.s32 %s22, 1
        %s210 = sand.u32 %s49, 1
        %s211 = scalar_lea.sflag [#allocation5], %s210
        %s212 = sand.u32 %s49, 1
        %s213 = smul.addr %s212, 8
        %s214 = scalar_lea.vmem [#allocation4], %s213
        // Predicated region
        $region29: #{tpu_custom_call.1} parent=27 // pred_check
          %p215 = pneg %p62
        $region30: #{tpu_custom_call.1} parent=27 // pred_check_branch
          %217 = sbr.rel (%p215) target = $region32
        $region31: #{tpu_custom_call.1} parent=27 // pred_region
          %218 = dma.done %s211, 128
        $region32: #{tpu_custom_call.1} parent=27 // pred_fallthru
          _
        %s219 = sand.u32 %s77, 1
        %s220 = scalar_lea.sflag [#allocation8], %s219
        %s221 = sand.u32 %s77, 1
        %s222 = smul.addr %s221, 2
        %s223 = scalar_lea.vmem [#allocation7], %s222
        // Predicated region
        $region33: #{tpu_custom_call.1} parent=27 // pred_check
          %p224 = pneg %p90
        $region34: #{tpu_custom_call.1} parent=27 // pred_check_branch
          %226 = sbr.rel (%p224) target = $region36
        $region35: #{tpu_custom_call.1} parent=27 // pred_region
          %227 = dma.done %s220, 32
        $region36: #{tpu_custom_call.1} parent=27 // pred_fallthru
          _
        %s228 = sand.u32 %s49, 1
        %s229 = scalar_lea.sflag [#allocation5], %s228
        %s230 = sand.u32 %s49, 1
        %s231 = smul.addr %s230, 8
        %s232 = scalar_lea.vmem [#allocation4], %s231
        %p233 = pneg %p62
        %p234 = pneg %p59
        %s235 = sand.u32 %s77, 1
        %s236 = scalar_lea.sflag [#allocation8], %s235
        %s237 = sand.u32 %s77, 1
        %s238 = smul.addr %s237, 2
        %s239 = scalar_lea.vmem [#allocation7], %s238
        %p240 = pneg %p90
        %p241 = pneg %p87
        %p242 = pneg %p116
        %p243 = pneg %p113
        %s244 = sand.u32 %s103, 1
        %s245 = scalar_lea.sflag [#allocation6], %s244
        %s246 = sand.u32 %s103, 1
        %s247 = smul.addr %s246, 8
        %s248 = scalar_lea.vmem [#allocation9], %s247
        %p249 = pneg %p142
        %p250 = pneg %p139
        %s251 = sand.u32 %s129, 1
        %s252 = scalar_lea.sflag [#allocation11], %s251
        %s253 = sand.u32 %s129, 1
        %s254 = smul.addr %s253, 8
        %s255 = scalar_lea.vmem [#allocation10], %s254
        %s256 = smul.u32 2, %s32
        %s257 = smul.u32 2, %s32
        %p258 = scmp.eq.s32.totalorder %s32, 0
        // Predicated region
        $region37: #{tpu_custom_call.1} parent=27 // pred_check
          %p259 = pneg %p258
        $region38: #{tpu_custom_call.1} parent=27 // pred_check_branch
          %261 = sbr.rel (%p259) target = $region40
        $region39: #{tpu_custom_call.1} parent=27 // pred_region
          %v262 = vlaneseq
          %vm263 = vcmp.ge.s32.totalorder %v262, 0
          %vm264 = vcmp.lt.s32.totalorder %v262, 256
          %vm265 = vmand %vm263, %vm264
          %266 = vst.msk [vmem:[#allocation2] sm:$0x3] %vm265, 0.0
          %267 = vst.msk [vmem:[#allocation3] sm:$0x3] %vm265, 0.0
        $region40: #{tpu_custom_call.1} parent=27 // pred_fallthru
          _
        %v268 = vld [vmem:[%s214] sm:$0xff]
        %v269 = vld [vmem:[%s223] sm:$0x3]
        %v271 = vcombine.high %v268, %v268
        %vm273 = vcmask 1043456
        %v274 = vsel %vm273, %v268, -inf
        %v275 = vrot.slane %v274, 4
        %v276 = vmax.f32 %v274, %v275
        %v277 = vrot.slane %v276, 2
        %v278 = vmax.f32 %v276, %v277
        %v279 = vrot.slane %v278, 1
        %v280 = vmax.f32 %v278, %v279
        %v281 = vsel %vm273, %v271, -inf
        %v282 = vrot.slane %v281, 4
        %v283 = vmax.f32 %v281, %v282
        %v284 = vrot.slane %v283, 2
        %v285 = vmax.f32 %v283, %v284
        %v286 = vrot.slane %v285, 1
        %v287 = vmax.f32 %v285, %v286
        %v290 = vcombine.low %v280, %v287
        %v292 = vsub.f32 %v268, %v290
        %v293 = vmul.f32 %v292, 1.442695
        %v294 = vpow.pop %v293
        %v296 = vcombine.high %v294, %v294
        %v298 = vsel %vm273, %v294, 0.0
        %v299 = vrot.slane %v298, 4
        %v300 = vadd.f32 %v298, %v299
        %v301 = vrot.slane %v300, 2
        %v302 = vadd.f32 %v300, %v301
        %v303 = vrot.slane %v302, 1
        %v304 = vadd.f32 %v302, %v303
        %v305 = vsel %vm273, %v296, 0.0
        %v306 = vrot.slane %v305, 4
        %v307 = vadd.f32 %v305, %v306
        %v308 = vrot.slane %v307, 2
        %v309 = vadd.f32 %v307, %v308
        %v310 = vrot.slane %v309, 1
        %v311 = vadd.f32 %v309, %v310
        %v312 = vlog2.pop %v304
        %v313 = vmul.f32 %v312, 0.6931472
        %v314 = vlog2.pop %v311
        %v315 = vmul.f32 %v314, 0.6931472
        %v316 = vadd.f32 %v280, %v313
        %v317 = vadd.f32 %v287, %v315
        %v318 = vlaneseq
        %v319 = vshrl.u32 %v318, 7
        %v320 = vlaneseq
        %v321 = vshrl.u32 %v320, 7
        %v322 = vsub.s32 0, %v321
        %v323 = vrot.slane %v269, %v322
        %v324 = vlaneseq
        %v325 = vshrl.u32 %v324, 7
        %v326 = vsub.s32 1, %v325
        %v327 = vrot.slane %v269, %v326
        %vm328 = vcmp.eq.s32.totalorder %v319, %v323
        %vm329 = vcmp.eq.s32.totalorder %v319, %v327
        %v330 = vsel %vm328, %v268, 0.0
        %v331 = vsel %vm329, %v271, 0.0
        %v332 = vsel %vm273, %v330, 0.0
        %v333 = vrot.slane %v332, 4
        %v334 = vadd.f32 %v332, %v333
        %v335 = vrot.slane %v334, 2
        %v336 = vadd.f32 %v334, %v335
        %v337 = vrot.slane %v336, 1
        %v338 = vadd.f32 %v336, %v337
        %v339 = vsel %vm273, %v331, 0.0
        %v340 = vrot.slane %v339, 4
        %v341 = vadd.f32 %v339, %v340
        %v342 = vrot.slane %v341, 2
        %v343 = vadd.f32 %v341, %v342
        %v344 = vrot.slane %v343, 1
        %v345 = vadd.f32 %v343, %v344
        %vm346 = vcmp.ne.s32.totalorder %v269, 4294967196
        %v347 = vsub.f32 %v316, %v338
        %v348 = vsub.f32 %v317, %v345
        %v351 = vcombine.low %v347, %v348
        %v353 = vunpack.c.l.s4 1966171168
        %v354 = vunpack.c.0.s8 %v353
        %v355 = vlaneseq
        %v356 = vshrl.u32 %v355, 7
        %v357 = vsub.s32 %v354, %v356
        %v358 = vrot.slane %v351, %v357
        %v360 = vunpack.c.l.s4 1966171168
        %v361 = vunpack.c.0.s8 %v360
        %v362 = vlaneseq
        %v363 = vshrl.u32 %v362, 7
        %v364 = vsub.s32 %v361, %v363
        %v365 = vrot.slane %v358, %v364
        %v367 = vsel %vm346, %v365, 0.0
        %v368 = vld [vmem:[#allocation2] sm:$0x3]
        %v369 = vadd.f32 %v368, %v367
        %v370 = vlaneseq
        %vm371 = vcmp.ge.s32.totalorder %v370, 0
        %vm372 = vcmp.lt.s32.totalorder %v370, 256
        %vm373 = vmand %vm371, %vm372
        %374 = vst.msk [vmem:[#allocation2] sm:$0x3] %vm373, %v369
        %v375 = vld [vmem:[#allocation3] sm:$0x3]
        %v376 = vsel %vm346, 1, 0
        %v377 = vcvt.s32.f32 %v376
        %v378 = vadd.f32 %v375, %v377
        %379 = vst.msk [vmem:[#allocation3] sm:$0x3] %vm373, %v378
        // Predicated region
        $region41: #{tpu_custom_call.1} parent=27 // pred_check
          %p380 = pneg %p258
        $region42: #{tpu_custom_call.1} parent=27 // pred_check_branch
          %382 = sbr.rel (%p380) target = $region44
        $region43: #{tpu_custom_call.1} parent=27 // pred_region
          %v383 = vld [vmem:[#allocation2] sm:$0x3]
          %v385 = vlaneseq
          %v386 = vshrl.u32 %v385, 7
          %v387 = vsub.s32 0, %v386
          %v388 = vrot.slane %v383, %v387
          %v389 = vlaneseq
          %v390 = vshrl.u32 %v389, 7
          %v391 = vsub.s32 1, %v390
          %v392 = vrot.slane %v383, %v391
          %vm395 = vcmask 1040384
          %v396 = vsel %vm395, %v388, 0.0
          %v397 = vsel %vm395, %v392, 0.0
          %v398 = vadd.f32 %v396, %v397
          %399 = vadd.xlane.f32.xlu0 %v398
          %v400 = vpop.xlane.xlu0 %399
          %v401 = vrot.slane %v400, 4
          %v402 = vadd.f32 %v400, %v401
          %v403 = vrot.slane %v402, 2
          %v404 = vadd.f32 %v402, %v403
          %v405 = vrot.slane %v404, 1
          %v406 = vadd.f32 %v404, %v405
          %s407 = vtos %v406
          %v408 = vstv %s407
          %409 = vst [vmem:[%s248] sm:$0xff] %v408
          %v410 = vld [vmem:[#allocation3] sm:$0x3]
          %v412 = vlaneseq
          %v413 = vshrl.u32 %v412, 7
          %v414 = vsub.s32 0, %v413
          %v415 = vrot.slane %v410, %v414
          %v416 = vlaneseq
          %v417 = vshrl.u32 %v416, 7
          %v418 = vsub.s32 1, %v417
          %v419 = vrot.slane %v410, %v418
          %v422 = vsel %vm395, %v415, 0.0
          %v423 = vsel %vm395, %v419, 0.0
          %v424 = vadd.f32 %v422, %v423
          %425 = vadd.xlane.f32.xlu0 %v424
          %v426 = vpop.xlane.xlu0 %425
          %v427 = vrot.slane %v426, 4
          %v428 = vadd.f32 %v426, %v427
          %v429 = vrot.slane %v428, 2
          %v430 = vadd.f32 %v428, %v429
          %v431 = vrot.slane %v430, 1
          %v432 = vadd.f32 %v430, %v431
          %s433 = vtos %v432
          %v434 = vstv %s433
          %435 = vst [vmem:[%s255] sm:$0xff] %v434
        $region44: #{tpu_custom_call.1} parent=27 // pred_fallthru
          _
        %s436 = sand.u32 %s103, 1
        %s437 = scalar_lea.sflag [#allocation6], %s436
        %s438 = sand.u32 %s103, 1
        %s439 = smul.addr %s438, 8
        %s440 = scalar_lea.vmem [#allocation9], %s439
        %s441 = sand.u32 %s129, 1
        %s442 = scalar_lea.sflag [#allocation11], %s441
        %s443 = sand.u32 %s129, 1
        %s444 = smul.addr %s443, 8
        %s445 = scalar_lea.vmem [#allocation10], %s444
        // Predicated region
        $region45: #{tpu_custom_call.1} parent=27 // pred_check
          %p446 = pneg %p113
        $region46: #{tpu_custom_call.1} parent=27 // pred_check_branch
          %448 = sbr.rel (%p446) target = $region48
        $region47: #{tpu_custom_call.1} parent=27 // pred_region
          %s450 = ssub.s32 128, 128
          %451 = vsyncadd %s437, %s450
          %s452 = smul.addr %s31, 128
          %s453 = scalar_lea.hbm %s2, %s452
          %s455 = sshll.u32 %s440, 4
          %s456 = int_to_ptr.vmem [resolvable:$true] %s455
          %458 = dma.vmem_to_hbm [thread:$0]  %s456, 128, %s453, %s437
        $region48: #{tpu_custom_call.1} parent=27 // pred_fallthru
          _
        // Predicated region
        $region49: #{tpu_custom_call.1} parent=27 // pred_check
          %p459 = pneg %p139
        $region50: #{tpu_custom_call.1} parent=27 // pred_check_branch
          %461 = sbr.rel (%p459) target = $region52
        $region51: #{tpu_custom_call.1} parent=27 // pred_region
          %s463 = ssub.s32 128, 128
          %464 = vsyncadd %s442, %s463
          %s465 = smul.addr %s31, 128
          %s466 = scalar_lea.hbm %s3, %s465
          %s468 = sshll.u32 %s445, 4
          %s469 = int_to_ptr.vmem [resolvable:$true] %s468
          %471 = dma.vmem_to_hbm [thread:$0]  %s469, 128, %s466, %s442
        $region52: #{tpu_custom_call.1} parent=27 // pred_fallthru
          _
      $region28: #{tpu_custom_call.1} parent=5 // pred_fallthru
        _
      %p472 = scmp.le.s32.totalorder 2, %s22
      // Predicated region
      $region53: #{tpu_custom_call.1} parent=5 // pred_check
        %p473 = pneg %p472
      $region54: #{tpu_custom_call.1} parent=5 // pred_check_branch
        %475 = sbr.rel (%p473) target = $region56
      $region55: #{tpu_custom_call.1} parent=5 // pred_region
        %s476 = ssub.s32 %s22, 2
        // Predicated region
        $region57: #{tpu_custom_call.1} parent=55 // pred_check
          %p477 = pneg %p119
        $region58: #{tpu_custom_call.1} parent=55 // pred_check_branch
          %479 = sbr.rel (%p477) target = $region60
        $region59: #{tpu_custom_call.1} parent=55 // pred_region
          %s480 = sand.u32 %s104, 1
          %s481 = scalar_lea.sflag [#allocation6], %s480
          %s482 = sand.u32 %s104, 1
          %s483 = smul.addr %s482, 8
          %s484 = scalar_lea.vmem [#allocation9], %s483
          %485 = dma.done %s481, 128
        $region60: #{tpu_custom_call.1} parent=55 // pred_fallthru
          _
        // Predicated region
        $region61: #{tpu_custom_call.1} parent=55 // pred_check
          %p486 = pneg %p145
        $region62: #{tpu_custom_call.1} parent=55 // pred_check_branch
          %488 = sbr.rel (%p486) target = $region64
        $region63: #{tpu_custom_call.1} parent=55 // pred_region
          %s489 = sand.u32 %s130, 1
          %s490 = scalar_lea.sflag [#allocation11], %s489
          %s491 = sand.u32 %s130, 1
          %s492 = smul.addr %s491, 8
          %s493 = scalar_lea.vmem [#allocation10], %s492
          %494 = dma.done %s490, 128
        $region64: #{tpu_custom_call.1} parent=55 // pred_fallthru
          _
      $region56: #{tpu_custom_call.1} parent=5 // pred_fallthru
        _
    $region6: #{tpu_custom_call.1} parent=1 // loop_footer
      %s26 = sadd.s32 1, %s22
    $region7: #{tpu_custom_call.1} parent=1 // loop_footer_branch
      %21 = sbr.rel target = $region3
    $region8: #{tpu_custom_call.1} parent=1 // loop_exit
      _
    %495 = vsyncpa [#allocation5], 1
    %s496 = scalar_lea.sflag [#allocation5], 1
    %497 = vsyncpa %s496, 1
    %498 = vsyncpa [#allocation8], 1
    %s499 = scalar_lea.sflag [#allocation8], 1
    %500 = vsyncpa %s499, 1
    %501 = vsyncpa [#allocation6], 1
    %s502 = scalar_lea.sflag [#allocation6], 1
    %503 = vsyncpa %s502, 1
    %504 = vsyncpa [#allocation11], 1
    %s505 = scalar_lea.sflag [#allocation11], 1
    %506 = vsyncpa %s505, 1

</llo_original>
